<compile_context>
chip_gen: v5e
topology: v5e:2x2
jax: 0.10.0
libtpu: 0.0.40
codegen_flags: <defaults>
</compile_context>

<pallas_src>
import functools

import jax
import jax.numpy as jnp
from jax import lax
from jax.experimental import pallas as pl
from jax.experimental.pallas import tpu as pltpu


NUM_CORES = 2                          # v7x dual-TC split; harmless on 1-TC chips
TARGET_BLOCK_BYTES = 1 * 1024 * 1024   # ~1 MiB per input block per buffer


def _bce_kernel(pred_ref, target_ref, out_ref, acc_ref, *,
                rows_valid, tile_r, steps_per_core):
    c = pl.program_id(0)   # core (parallel) axis
    i = pl.program_id(1)   # streaming reduction (arbitrary) axis

    @pl.when(i == 0)
    def _():
        acc_ref[...] = jnp.zeros_like(acc_ref)

    # Unclamped global row offset of this step. The input index_map clamps the
    # block index for fully out-of-range steps; the mask below uses the
    # UNclamped offset so any re-read rows contribute exactly 0.
    row_start = (c * steps_per_core + i) * tile_r

    def block_partial(masked):
        # Widen to f32 in-kernel (inputs may arrive as bf16/f16/f32).
        p = pred_ref[...].astype(jnp.float32)
        t = target_ref[...].astype(jnp.float32)
        # PyTorch BCELoss clamps log terms at -100 to avoid -inf / 0*inf.
        log_p = jnp.maximum(jnp.log(p), jnp.float32(-100.0))
        log_1mp = jnp.maximum(jnp.log(1.0 - p), jnp.float32(-100.0))
        # -(t*log_p + (1-t)*log_1mp) with one fewer VALU op.
        loss = -(log_1mp + t * (log_p - log_1mp))
        if masked:
            # Mask AFTER computing the loss so garbage/NaN tail rows are
            # selected away (not multiplied).
            row = row_start + lax.broadcasted_iota(jnp.int32, loss.shape, 0)
            loss = jnp.where(row < rows_valid, loss, jnp.float32(0.0))
        # (tile_r, C) -> (tile_r//8, 8, C); sum over leading axis = pure VPU
        # vreg adds, no per-step cross-lane XLU work.
        return jnp.sum(loss.reshape(-1, 8, loss.shape[-1]), axis=0)

    needs_mask = row_start + tile_r > rows_valid

    @pl.when(jnp.logical_not(needs_mask))
    def _():
        acc_ref[...] += block_partial(False)

    @pl.when(needs_mask)
    def _():
        acc_ref[...] += block_partial(True)

    @pl.when(i == steps_per_core - 1)
    def _():
        out_ref[...] = acc_ref[...]   # per-core partial sums (8, C)


def bce_loss(pred, target):
    """pred: [B, 1, H, W] probabilities in (0, 1); target: [B, H, W] in [0, 1]."""
    pred = jnp.squeeze(pred, axis=1)  # matches pred.squeeze(dim=1)
    assert pred.shape == target.shape, (pred.shape, target.shape)

    n = pred.size
    C = pred.shape[-1]
    R = n // C

    # Collapse leading dims only (minor dim preserved -> cheap view); no pad,
    # no dtype cast — the kernel handles both.
    P = pred.reshape(R, C)
    T = target.reshape(R, C)

    row_bytes = C * max(P.dtype.itemsize, T.dtype.itemsize)
    rows8 = -(-R // 8) * 8
    tile_r = (TARGET_BLOCK_BYTES // max(row_bytes, 1)) // 8 * 8
    tile_r = max(8, min(tile_r, rows8))

    total_blocks = -(-R // tile_r)
    steps_per_core = -(-total_blocks // NUM_CORES)
    last_block = total_blocks - 1

    def in_map(c, i):
        # Clamp fully out-of-range steps onto the last block; the kernel's row
        # mask (unclamped index) zeroes their contribution.
        return (jnp.minimum(c * steps_per_core + i, last_block), 0)

    in_spec = pl.BlockSpec((tile_r, C), in_map)

    partials = pl.pallas_call(
        functools.partial(_bce_kernel, rows_valid=R, tile_r=tile_r,
                          steps_per_core=steps_per_core),
        out_shape=jax.ShapeDtypeStruct((NUM_CORES, 8, C), jnp.float32),
        grid_spec=pltpu.PrefetchScalarGridSpec(
            num_scalar_prefetch=0,
            grid=(NUM_CORES, steps_per_core),
            in_specs=[in_spec, in_spec],
            out_specs=pl.BlockSpec((None, 8, C), lambda c, i: (c, 0, 0)),
            scratch_shapes=[pltpu.VMEM((8, C), jnp.float32)],
        ),
        compiler_params=pltpu.CompilerParams(
            dimension_semantics=("parallel", "arbitrary"),
            vmem_limit_bytes=32 * 1024 * 1024,
        ),
        cost_estimate=pl.CostEstimate(
            flops=7 * n,
            transcendentals=2 * n,
            bytes_accessed=n * (P.dtype.itemsize + T.dtype.itemsize)
            + NUM_CORES * 8 * C * 4,
        ),
    )(P, T)

    # Tiny final reduce of the per-core partials + mean normalization.
    return jnp.sum(partials) / jnp.float32(n)


if __name__ == "__main__":
    key = jax.random.PRNGKey(0)
    k1, k2 = jax.random.split(key)

    B, H, W = 2, 16, 16
    # pred must be probabilities in (0, 1) for BCELoss.
    pred = jax.nn.sigmoid(jax.random.normal(k1, (B, 1, H, W), dtype=jnp.float32))
    target = jax.random.uniform(k2, (B, H, W), dtype=jnp.float32)

    loss = jax.block_until_ready(bce_loss(pred, target))

    # Sanity check against a pure-JAX reference of torch.nn.BCELoss semantics.
    p = jnp.squeeze(pred, axis=1)
    ref = -jnp.mean(
        target * jnp.maximum(jnp.log(p), -100.0)
        + (1.0 - target) * jnp.maximum(jnp.log(1.0 - p), -100.0)
    )
    assert jnp.allclose(loss, ref, atol=1e-5, rtol=1e-5), (loss, ref)

    print("KERNEL_OK")
</pallas_src>

<mosaic_0001>
module attributes {stable_mosaic.version = 11 : i64} {
  func.func @_bce_kernel(%arg0: i32, %arg1: i32, %arg2: memref<32x16xf32, #tpu.memory_space<vmem>>, %arg3: memref<32x16xf32, #tpu.memory_space<vmem>>, %arg4: memref<1x8x16xf32, #tpu.memory_space<vmem>>, %arg5: memref<8x16xf32, #tpu.memory_space<vmem>>) attributes {dimension_semantics = [#tpu.dimension_semantics<parallel>, #tpu.dimension_semantics<arbitrary>], iteration_bounds = array<i64: 2, 1>, scalar_prefetch = 0 : i64, scratch_operands = 1 : i64, tpu.core_type = #tpu.core_type<tc>, window_params = [{transform_indices = @transform_0, window_bounds = array<i64: 32, 16>}, {transform_indices = @transform_1, window_bounds = array<i64: 32, 16>}, {transform_indices = @transform_2, window_bounds = array<i64: 1, 8, 16>}]} {
    %c0_i32 = arith.constant 0 : i32
    %0 = arith.cmpi eq, %arg1, %c0_i32 : i32
    %1 = arith.extui %0 : i1 to i32
    %c0_i32_0 = arith.constant 0 : i32
    %2 = arith.cmpi ne, %1, %c0_i32_0 : i32
    scf.if %2 {
      %cst = arith.constant 0.000000e+00 : f32
      %16 = vector.broadcast %cst : f32 to vector<8x16xf32>
      %c0 = arith.constant 0 : index
      %c0_7 = arith.constant 0 : index
      %17 = vector.load %arg5[%c0, %c0_7] : memref<8x16xf32, #tpu.memory_space<vmem>>, vector<8x16xf32>
      tpu.vector_store %arg5[%c0, %c0_7], %16 {strides = array<i32>} : memref<8x16xf32, #tpu.memory_space<vmem>>, vector<8x16xf32>,
    } else {
    }
    %c1_i32 = arith.constant 1 : i32
    %3 = arith.muli %arg0, %c1_i32 : i32
    %4 = arith.addi %3, %arg1 : i32
    %c32_i32 = arith.constant 32 : i32
    %5 = arith.muli %4, %c32_i32 : i32
    %c32_i32_1 = arith.constant 32 : i32
    %6 = arith.addi %5, %c32_i32_1 : i32
    %c32_i32_2 = arith.constant 32 : i32
    %7 = arith.cmpi sgt, %6, %c32_i32_2 : i32
    %true = arith.constant true
    %8 = arith.xori %7, %true : i1
    %9 = arith.extui %8 : i1 to i32
    %c0_i32_3 = arith.constant 0 : i32
    %10 = arith.cmpi ne, %9, %c0_i32_3 : i32
    scf.if %10 {
      %c0 = arith.constant 0 : index
      %c0_7 = arith.constant 0 : index
      %16 = vector.load %arg5[%c0, %c0_7] : memref<8x16xf32, #tpu.memory_space<vmem>>, vector<8x16xf32>
      %c0_8 = arith.constant 0 : index
      %c0_9 = arith.constant 0 : index
      %17 = vector.load %arg2[%c0_8, %c0_9] : memref<32x16xf32, #tpu.memory_space<vmem>>, vector<32x16xf32>
      %c0_10 = arith.constant 0 : index
      %c0_11 = arith.constant 0 : index
      %18 = vector.load %arg3[%c0_10, %c0_11] : memref<32x16xf32, #tpu.memory_space<vmem>>, vector<32x16xf32>
      %19 = math.log %17 : vector<32x16xf32>
      %cst = arith.constant -1.000000e+02 : f32
      %20 = vector.broadcast %cst : f32 to vector<32x16xf32>
      %21 = arith.maximumf %19, %20 : vector<32x16xf32>
      %cst_12 = arith.constant 1.000000e+00 : f32
      %22 = vector.broadcast %cst_12 : f32 to vector<32x16xf32>
      %23 = arith.subf %22, %17 : vector<32x16xf32>
      %24 = math.log %23 : vector<32x16xf32>
      %cst_13 = arith.constant -1.000000e+02 : f32
      %25 = vector.broadcast %cst_13 : f32 to vector<32x16xf32>
      %26 = arith.maximumf %24, %25 : vector<32x16xf32>
      %27 = arith.subf %21, %26 : vector<32x16xf32>
      %28 = arith.mulf %18, %27 : vector<32x16xf32>
      %29 = arith.addf %26, %28 : vector<32x16xf32>
      %cst_14 = arith.constant 0.000000e+00 : f32
      %30 = vector.broadcast %cst_14 : f32 to vector<32x16xf32>
      %31 = arith.subf %30, %29 : vector<32x16xf32>
      %32 = vector.shape_cast %31 : vector<32x16xf32> to vector<4x8x16xf32>
      %cst_15 = arith.constant dense<0.000000e+00> : vector<8x16xf32>
      %33 = vector.multi_reduction <add>, %32, %cst_15 [0] : vector<4x8x16xf32> to vector<8x16xf32>
      %34 = arith.addf %16, %33 : vector<8x16xf32>
      %c0_16 = arith.constant 0 : index
      %c0_17 = arith.constant 0 : index
      %35 = vector.load %arg5[%c0_16, %c0_17] : memref<8x16xf32, #tpu.memory_space<vmem>>, vector<8x16xf32>
      tpu.vector_store %arg5[%c0_16, %c0_17], %34 {strides = array<i32>} : memref<8x16xf32, #tpu.memory_space<vmem>>, vector<8x16xf32>,
    } else {
    }
    %11 = arith.extui %7 : i1 to i32
    %c0_i32_4 = arith.constant 0 : i32
    %12 = arith.cmpi ne, %11, %c0_i32_4 : i32
    scf.if %12 {
      %c0 = arith.constant 0 : index
      %c0_7 = arith.constant 0 : index
      %16 = vector.load %arg5[%c0, %c0_7] : memref<8x16xf32, #tpu.memory_space<vmem>>, vector<8x16xf32>
      %c0_8 = arith.constant 0 : index
      %c0_9 = arith.constant 0 : index
      %17 = vector.load %arg2[%c0_8, %c0_9] : memref<32x16xf32, #tpu.memory_space<vmem>>, vector<32x16xf32>
      %c0_10 = arith.constant 0 : index
      %c0_11 = arith.constant 0 : index
      %18 = vector.load %arg3[%c0_10, %c0_11] : memref<32x16xf32, #tpu.memory_space<vmem>>, vector<32x16xf32>
      %19 = math.log %17 : vector<32x16xf32>
      %cst = arith.constant -1.000000e+02 : f32
      %20 = vector.broadcast %cst : f32 to vector<32x16xf32>
      %21 = arith.maximumf %19, %20 : vector<32x16xf32>
      %cst_12 = arith.constant 1.000000e+00 : f32
      %22 = vector.broadcast %cst_12 : f32 to vector<32x16xf32>
      %23 = arith.subf %22, %17 : vector<32x16xf32>
      %24 = math.log %23 : vector<32x16xf32>
      %cst_13 = arith.constant -1.000000e+02 : f32
      %25 = vector.broadcast %cst_13 : f32 to vector<32x16xf32>
      %26 = arith.maximumf %24, %25 : vector<32x16xf32>
      %27 = arith.subf %21, %26 : vector<32x16xf32>
      %28 = arith.mulf %18, %27 : vector<32x16xf32>
      %29 = arith.addf %26, %28 : vector<32x16xf32>
      %cst_14 = arith.constant 0.000000e+00 : f32
      %30 = vector.broadcast %cst_14 : f32 to vector<32x16xf32>
      %31 = arith.subf %30, %29 : vector<32x16xf32>
      %32 = tpu.iota {dimensions = array<i32: 0>} : vector<32x16xi32>
      %33 = vector.broadcast %5 : i32 to vector<32x16xi32>
      %34 = arith.addi %33, %32 : vector<32x16xi32>
      %c32_i32_15 = arith.constant 32 : i32
      %35 = vector.broadcast %c32_i32_15 : i32 to vector<32x16xi32>
      %36 = arith.cmpi slt, %34, %35 : vector<32x16xi32>
      %cst_16 = arith.constant 0.000000e+00 : f32
      %37 = vector.broadcast %cst_16 : f32 to vector<32x16xf32>
      %38 = arith.select %36, %31, %37 : vector<32x16xi1>, vector<32x16xf32>
      %39 = vector.shape_cast %38 : vector<32x16xf32> to vector<4x8x16xf32>
      %cst_17 = arith.constant dense<0.000000e+00> : vector<8x16xf32>
      %40 = vector.multi_reduction <add>, %39, %cst_17 [0] : vector<4x8x16xf32> to vector<8x16xf32>
      %41 = arith.addf %16, %40 : vector<8x16xf32>
      %c0_18 = arith.constant 0 : index
      %c0_19 = arith.constant 0 : index
      %42 = vector.load %arg5[%c0_18, %c0_19] : memref<8x16xf32, #tpu.memory_space<vmem>>, vector<8x16xf32>
      tpu.vector_store %arg5[%c0_18, %c0_19], %41 {strides = array<i32>} : memref<8x16xf32, #tpu.memory_space<vmem>>, vector<8x16xf32>,
    } else {
    }
    %c0_i32_5 = arith.constant 0 : i32
    %13 = arith.cmpi eq, %arg1, %c0_i32_5 : i32
    %14 = arith.extui %13 : i1 to i32
    %c0_i32_6 = arith.constant 0 : i32
    %15 = arith.cmpi ne, %14, %c0_i32_6 : i32
    scf.if %15 {
      %c0 = arith.constant 0 : index
      %c0_7 = arith.constant 0 : index
      %16 = vector.load %arg5[%c0, %c0_7] : memref<8x16xf32, #tpu.memory_space<vmem>>, vector<8x16xf32>
      %c0_8 = arith.constant 0 : index
      %c0_9 = arith.constant 0 : index
      %c0_10 = arith.constant 0 : index
      %17 = vector.load %arg4[%c0_8, %c0_9, %c0_10] : memref<1x8x16xf32, #tpu.memory_space<vmem>>, vector<1x8x16xf32>
      %18 = vector.shape_cast %17 : vector<1x8x16xf32> to vector<8x16xf32>
      %19 = vector.shape_cast %16 : vector<8x16xf32> to vector<1x8x16xf32>
      tpu.vector_store %arg4[%c0_8, %c0_9, %c0_10], %19 {strides = array<i32>} : memref<1x8x16xf32, #tpu.memory_space<vmem>>, vector<1x8x16xf32>,
    } else {
    }
    return
  }
  func.func @transform_0(%arg0: i32, %arg1: i32) -> (i32, i32) {
    %c1_i32 = arith.constant 1 : i32
    %0 = arith.muli %arg0, %c1_i32 : i32
    %1 = arith.addi %0, %arg1 : i32
    %c0_i32 = arith.constant 0 : i32
    %2 = arith.minsi %1, %c0_i32 : i32
    %c0_i32_0 = arith.constant 0 : i32
    %c0_i32_1 = arith.constant 0 : i32
    return %2, %c0_i32_0 : i32, i32
  }
  func.func @transform_1(%arg0: i32, %arg1: i32) -> (i32, i32) {
    %c1_i32 = arith.constant 1 : i32
    %0 = arith.muli %arg0, %c1_i32 : i32
    %1 = arith.addi %0, %arg1 : i32
    %c0_i32 = arith.constant 0 : i32
    %2 = arith.minsi %1, %c0_i32 : i32
    %c0_i32_0 = arith.constant 0 : i32
    %c0_i32_1 = arith.constant 0 : i32
    return %2, %c0_i32_0 : i32, i32
  }
  func.func @transform_2(%arg0: i32, %arg1: i32) -> (i32, i32, i32) {
    %c0_i32 = arith.constant 0 : i32
    %c0_i32_0 = arith.constant 0 : i32
    %c0_i32_1 = arith.constant 0 : i32
    return %arg0, %c0_i32, %c0_i32_0 : i32, i32, i32
  }
}

</mosaic_0001>

<llo_original>
// kernel: tpu_custom_call.1
$region0: #{tpu_custom_call.1}
  #allocation0 [shape = 'u32[]', space=smem, size = 0x4, offset = 0x4, fixed_abs, tag = 'smem constant byte address 0x4 - core index']
  #allocation1 [shape = 'u32[72,128]{1,0:T(1,128)}', space=vmem, size = 0x9000, scoped, tag = 'internal scratch']
  #allocation2 [shape = 'f32[8,16]{1,0:T(8,128)}', space=vmem, size = 0x1000, scoped, tag = 'scratch operand']
  %s0 = inlined_call_operand.vmem [shape: f32[32,16], index: 0, kind: input, shape index: {}]
  %s1 = inlined_call_operand.vmem [shape: f32[32,16], index: 1, kind: input, shape index: {}]
  %s2 = inlined_call_operand.hbm [shape: f32[2,8,16], index: 2, kind: output, shape index: {}]
  %s3 = sld [smem:[#allocation0]]
  $region57: #{tpu_custom_call.1} parent=0
    _
  %s5 = ssub.s32 1, %s3
  %s6 = scalar_select 0, %s5, %s3
  $region1: #{tpu_custom_call.1} parent=0
    #allocation3 [shape = 'u8[8192]{0}', space=vmem, size = 0x2000, scoped, tag = 'output window, operand 0']
    #allocation4 [shape = 's32[2]{0}', space=sflag, size = 0x8, scoped, tag = 'scoped memory for tpu_custom_call.1']
    %7 = vsyncpa [#allocation4], 0
    %s8 = scalar_lea.sflag [#allocation4], 1
    %9 = vsyncpa %s8, 0
    loop: start=0, step=1, limit=4
    $region2: #{tpu_custom_call.1} parent=1 // loop_pre_header
      _
    $region3: #{tpu_custom_call.1} parent=1 // loop_header
      %s11 = sphi 0, %s15
      %p12 = scmp.ge.s32.totalorder %s11, 4
      %s18 = sphi 0, %s30
      %s19 = sphi 0, %s26
      %s20 = sphi 0, %s18
      %s21 = sphi 0, %s19
      %s22 = sphi 0, %s20
      %s23 = sphi 0, %s21
      %s39 = sphi 0, %s41
      %s42 = sphi 0, %s39
      %s43 = sphi 0, %s42
      %s59 = sphi 0, %s43
      %s71 = sphi 0, %s73
      %s74 = sphi 0, %s71
      %s75 = sphi 0, %s74
      %s91 = sphi 0, %s75
      %s97 = sphi 0, %s99
      %s100 = sphi 0, %s97
      %s101 = sphi 0, %s100
      %s117 = sphi 0, %s101
    $region4: #{tpu_custom_call.1} parent=1 // loop_header_branch
      %14 = sbr.rel (%p12) target = $region8
    $region5: #{tpu_custom_call.1} parent=1 // loop_body
      %s16 = ssub.s32 %s11, 1
      %s17 = ssub.s32 %s11, 2
      %s24 = sadd.s32 1, %s19
      %p25 = scmp.ge.s32.totalorder %s24, 1
      %s26 = scalar_select %p25, 0, %s24
      %s27 = sadd.s32 1, %s18
      %s28 = scalar_select %p25, %s27, %s18
      %p29 = scmp.ge.s32.totalorder %s28, 2
      %s30 = scalar_select %p29, 0, %s28
      %s31 = sadd.s32 %s18, %s19
      %p32 = scmp.lt.s32.totalorder %s31, 0
      %s33 = scalar_select %p32, %s31, 0
      %s34 = sadd.s32 %s30, %s26
      %p35 = scmp.lt.s32.totalorder %s34, 0
      %s36 = scalar_select %p35, %s34, 0
      %s37 = ssub.s32 %s33, %s36
      %p38 = scmp.eq.s32.totalorder %s37, 0
      %s40 = sadd.s32 %s39, 1
      %s41 = scalar_select %p38, %s39, %s40
      %p44 = pneg %p38
      %p45 = scmp.eq.s32.totalorder %s11, 1
      %p46 = por %p44, %p45
      %p47 = scmp.ne.s32.totalorder %s39, %s42
      %p48 = scmp.eq.s32.totalorder %s11, 0
      %p49 = por %p47, %p48
      %p50 = scmp.ne.s32.totalorder %s39, %s42
      %p51 = scmp.eq.s32.totalorder %s16, 1
      %p52 = por %p50, %p51
      %p53 = scmp.ne.s32.totalorder %s42, %s43
      %p54 = scmp.eq.s32.totalorder %s16, 0
      %p55 = por %p53, %p54
      %p56 = scmp.ne.s32.totalorder %s42, %s43
      %p57 = scmp.eq.s32.totalorder %s17, 1
      %p58 = por %p56, %p57
      %p60 = scmp.ne.s32.totalorder %s43, %s59
      %p61 = scmp.eq.s32.totalorder %s17, 0
      %p62 = por %p60, %p61
      %s63 = sadd.s32 %s18, %s19
      %p64 = scmp.lt.s32.totalorder %s63, 0
      %s65 = scalar_select %p64, %s63, 0
      %s66 = sadd.s32 %s30, %s26
      %p67 = scmp.lt.s32.totalorder %s66, 0
      %s68 = scalar_select %p67, %s66, 0
      %s69 = ssub.s32 %s65, %s68
      %p70 = scmp.eq.s32.totalorder %s69, 0
      %s72 = sadd.s32 %s71, 1
      %s73 = scalar_select %p70, %s71, %s72
      %p76 = pneg %p70
      %p77 = scmp.eq.s32.totalorder %s11, 1
      %p78 = por %p76, %p77
      %p79 = scmp.ne.s32.totalorder %s71, %s74
      %p80 = scmp.eq.s32.totalorder %s11, 0
      %p81 = por %p79, %p80
      %p82 = scmp.ne.s32.totalorder %s71, %s74
      %p83 = scmp.eq.s32.totalorder %s16, 1
      %p84 = por %p82, %p83
      %p85 = scmp.ne.s32.totalorder %s74, %s75
      %p86 = scmp.eq.s32.totalorder %s16, 0
      %p87 = por %p85, %p86
      %p88 = scmp.ne.s32.totalorder %s74, %s75
      %p89 = scmp.eq.s32.totalorder %s17, 1
      %p90 = por %p88, %p89
      %p92 = scmp.ne.s32.totalorder %s75, %s91
      %p93 = scmp.eq.s32.totalorder %s17, 0
      %p94 = por %p92, %p93
      %s95 = ssub.s32 %s18, %s30
      %p96 = scmp.eq.s32.totalorder %s95, 0
      %s98 = sadd.s32 %s97, 1
      %s99 = scalar_select %p96, %s97, %s98
      %p102 = pneg %p96
      %p103 = scmp.eq.s32.totalorder %s11, 1
      %p104 = por %p102, %p103
      %p105 = scmp.ne.s32.totalorder %s97, %s100
      %p106 = scmp.eq.s32.totalorder %s11, 0
      %p107 = por %p105, %p106
      %p108 = scmp.ne.s32.totalorder %s97, %s100
      %p109 = scmp.eq.s32.totalorder %s16, 1
      %p110 = por %p108, %p109
      %p111 = scmp.ne.s32.totalorder %s100, %s101
      %p112 = scmp.eq.s32.totalorder %s16, 0
      %p113 = por %p111, %p112
      %p114 = scmp.ne.s32.totalorder %s100, %s101
      %p115 = scmp.eq.s32.totalorder %s17, 1
      %p116 = por %p114, %p115
      %p118 = scmp.ne.s32.totalorder %s101, %s117
      %p119 = scmp.eq.s32.totalorder %s17, 0
      %p120 = por %p118, %p119
      %p121 = scmp.le.s32.totalorder 1, %s11
      %p122 = scmp.lt.s32.totalorder %s11, 3
      %p123 = pnand %p121, %p122
      %p124 = pneg %p123
      // Predicated region
      $region9: #{tpu_custom_call.1} parent=5 // pred_check
        _
      $region10: #{tpu_custom_call.1} parent=5 // pred_check_branch
        %126 = sbr.rel (%p123) target = $region12
      $region11: #{tpu_custom_call.1} parent=5 // pred_region
        %s127 = ssub.s32 %s11, 1
      $region12: #{tpu_custom_call.1} parent=5 // pred_fallthru
        _
      %p128 = scmp.lt.s32.totalorder %s11, 2
      // Predicated region
      $region13: #{tpu_custom_call.1} parent=5 // pred_check
        %p129 = pneg %p128
      $region14: #{tpu_custom_call.1} parent=5 // pred_check_branch
        %131 = sbr.rel (%p129) target = $region16
      $region15: #{tpu_custom_call.1} parent=5 // pred_region
        // Predicated region
        $region17: #{tpu_custom_call.1} parent=15 // pred_check
          %p132 = pneg %p49
        $region18: #{tpu_custom_call.1} parent=15 // pred_check_branch
          %134 = sbr.rel (%p132) target = $region20
        $region19: #{tpu_custom_call.1} parent=15 // pred_region
          %s135 = sadd.s32 %s18, %s19
          %p136 = scmp.lt.s32.totalorder %s135, 0
          %s137 = scalar_select %p136, %s135, 0
          %s138 = smul.u32 4, %s137
          %p139 = scmp.lt.s32.totalorder %s138, 3
          %s140 = scalar_select %p139, %s138, 3
          %s141 = smul.addr %s140, 8
          %s142 = scalar_lea.vmem %s0, %s141
          %s143 = sadd.s32 %s18, %s19
          %p144 = scmp.lt.s32.totalorder %s143, 0
          %s145 = scalar_select %p144, %s143, 0
          %s146 = smul.u32 4, %s145
        $region20: #{tpu_custom_call.1} parent=15 // pred_fallthru
          _
        // Predicated region
        $region21: #{tpu_custom_call.1} parent=15 // pred_check
          %p147 = pneg %p81
        $region22: #{tpu_custom_call.1} parent=15 // pred_check_branch
          %149 = sbr.rel (%p147) target = $region24
        $region23: #{tpu_custom_call.1} parent=15 // pred_region
          %s150 = sadd.s32 %s18, %s19
          %p151 = scmp.lt.s32.totalorder %s150, 0
          %s152 = scalar_select %p151, %s150, 0
          %s153 = smul.u32 4, %s152
          %p154 = scmp.lt.s32.totalorder %s153, 3
          %s155 = scalar_select %p154, %s153, 3
          %s156 = smul.addr %s155, 8
          %s157 = scalar_lea.vmem %s1, %s156
          %s158 = sadd.s32 %s18, %s19
          %p159 = scmp.lt.s32.totalorder %s158, 0
          %s160 = scalar_select %p159, %s158, 0
          %s161 = smul.u32 4, %s160
        $region24: #{tpu_custom_call.1} parent=15 // pred_fallthru
          _
      $region16: #{tpu_custom_call.1} parent=5 // pred_fallthru
        _
      %p162 = scmp.le.s32.totalorder 1, %s11
      %p163 = scmp.lt.s32.totalorder %s11, 3
      %p164 = pnand %p162, %p163
      %p165 = pneg %p164
      // Predicated region
      $region25: #{tpu_custom_call.1} parent=5 // pred_check
        _
      $region26: #{tpu_custom_call.1} parent=5 // pred_check_branch
        %167 = sbr.rel (%p164) target = $region28
      $region27: #{tpu_custom_call.1} parent=5 // pred_region
        %s168 = ssub.s32 %s11, 1
        %s169 = sadd.s32 %s20, %s21
        %p170 = scmp.lt.s32.totalorder %s169, 0
        %s171 = scalar_select %p170, %s169, 0
        %s172 = smul.u32 4, %s171
        %p173 = scmp.lt.s32.totalorder %s172, 3
        %s174 = scalar_select %p173, %s172, 3
        %s175 = smul.addr %s174, 8
        %s176 = scalar_lea.vmem %s0, %s175
        %p177 = pneg %p55
        %p178 = pneg %p52
        %s179 = sadd.s32 %s20, %s21
        %p180 = scmp.lt.s32.totalorder %s179, 0
        %s181 = scalar_select %p180, %s179, 0
        %s182 = smul.u32 4, %s181
        %p183 = scmp.lt.s32.totalorder %s182, 3
        %s184 = scalar_select %p183, %s182, 3
        %s185 = smul.addr %s184, 8
        %s186 = scalar_lea.vmem %s1, %s185
        %p187 = pneg %p87
        %p188 = pneg %p84
        %p189 = pneg %p113
        %p190 = pneg %p110
        %s191 = sand.u32 %s100, 1
        %s192 = scalar_lea.sflag [#allocation4], %s191
        %s193 = sand.u32 %s100, 1
        %s194 = smul.addr %s193, 8
        %s195 = scalar_lea.vmem [#allocation3], %s194
        %s196 = sadd.s32 %s20, %s21
        %p197 = scmp.lt.s32.totalorder %s196, 0
        %s198 = scalar_select %p197, %s196, 0
        %s199 = smul.u32 4, %s198
        %p200 = scmp.lt.s32.totalorder %s199, 3
        %s201 = scalar_select %p200, %s199, 3
        %s202 = smul.addr %s201, 8
        %s203 = scalar_lea.vmem %s0, %s202
        %s204 = sadd.s32 %s20, %s21
        %p205 = scmp.lt.s32.totalorder %s204, 0
        %s206 = scalar_select %p205, %s204, 0
        %s207 = smul.u32 4, %s206
        %s208 = sadd.s32 %s20, %s21
        %p209 = scmp.lt.s32.totalorder %s208, 0
        %s210 = scalar_select %p209, %s208, 0
        %s211 = smul.u32 4, %s210
        %p212 = scmp.lt.s32.totalorder %s211, 3
        %s213 = scalar_select %p212, %s211, 3
        %s214 = smul.addr %s213, 8
        %s215 = scalar_lea.vmem %s1, %s214
        %s216 = sadd.s32 %s20, %s21
        %p217 = scmp.lt.s32.totalorder %s216, 0
        %s218 = scalar_select %p217, %s216, 0
        %s219 = smul.u32 4, %s218
        %p220 = scmp.eq.s32.totalorder %s21, 0
        // Predicated region
        $region29: #{tpu_custom_call.1} parent=27 // pred_check
          %p221 = pneg %p220
        $region30: #{tpu_custom_call.1} parent=27 // pred_check_branch
          %223 = sbr.rel (%p221) target = $region32
        $region31: #{tpu_custom_call.1} parent=27 // pred_region
          %vm224 = vcmask 130048
          %225 = vst.msk [vmem:[#allocation2] sm:$0xff] %vm224, 0.0
        $region32: #{tpu_custom_call.1} parent=27 // pred_fallthru
          _
        %s226 = sadd.s32 %s20, %s21
        %s227 = smul.u32 %s226, 32
        %s228 = sadd.s32 %s227, 32
        %p229 = scmp.gt.s32.totalorder %s228, 32
        %p230 = scmp.le.s32.totalorder %s228, 32
        // Predicated region
        $region33: #{tpu_custom_call.1} parent=27 // pred_check
          %p231 = pneg %p230
        $region34: #{tpu_custom_call.1} parent=27 // pred_check_branch
          %233 = sbr.rel (%p231) target = $region36
        $region35: #{tpu_custom_call.1} parent=27 // pred_region
          %v234 = vld [vmem:[#allocation2] sm:$0xff]
          %v235 = vld [vmem:[%s203] sm:$0xff]
          %v236 = vld [vmem:[%s203 + $0x8] sm:$0xff]
          %v237 = vld [vmem:[%s203 + $0x10] sm:$0xff]
          %v238 = vld [vmem:[%s203 + $0x18] sm:$0xff]
          %v239 = vld [vmem:[%s215] sm:$0xff]
          %v240 = vld [vmem:[%s215 + $0x8] sm:$0xff]
          %v241 = vld [vmem:[%s215 + $0x10] sm:$0xff]
          %v242 = vld [vmem:[%s215 + $0x18] sm:$0xff]
          %v243 = vlog2.pop %v235
          %v244 = vmul.f32 %v243, 0.6931472
          %v245 = vlog2.pop %v236
          %v246 = vmul.f32 %v245, 0.6931472
          %v247 = vlog2.pop %v237
          %v248 = vmul.f32 %v247, 0.6931472
          %v249 = vlog2.pop %v238
          %v250 = vmul.f32 %v249, 0.6931472
          %v251 = vmax.f32 %v244, -100.0
          %v252 = vmax.f32 %v246, -100.0
          %v253 = vmax.f32 %v248, -100.0
          %v254 = vmax.f32 %v250, -100.0
          %v255 = vsub.f32 1.0, %v235
          %v256 = vsub.f32 1.0, %v236
          %v257 = vsub.f32 1.0, %v237
          %v258 = vsub.f32 1.0, %v238
          %v259 = vlog2.pop %v255
          %v260 = vmul.f32 %v259, 0.6931472
          %v261 = vlog2.pop %v256
          %v262 = vmul.f32 %v261, 0.6931472
          %v263 = vlog2.pop %v257
          %v264 = vmul.f32 %v263, 0.6931472
          %v265 = vlog2.pop %v258
          %v266 = vmul.f32 %v265, 0.6931472
          %v267 = vmax.f32 %v260, -100.0
          %v268 = vmax.f32 %v262, -100.0
          %v269 = vmax.f32 %v264, -100.0
          %v270 = vmax.f32 %v266, -100.0
          %v271 = vsub.f32 %v251, %v267
          %v272 = vsub.f32 %v252, %v268
          %v273 = vsub.f32 %v253, %v269
          %v274 = vsub.f32 %v254, %v270
          %v275 = vmul.f32 %v239, %v271
          %v276 = vmul.f32 %v240, %v272
          %v277 = vmul.f32 %v241, %v273
          %v278 = vmul.f32 %v242, %v274
          %v279 = vadd.f32 %v267, %v275
          %v280 = vadd.f32 %v268, %v276
          %v281 = vadd.f32 %v269, %v277
          %v282 = vadd.f32 %v270, %v278
          %v283 = vsub.f32 0.0, %v279
          %v284 = vsub.f32 0.0, %v280
          %v285 = vsub.f32 0.0, %v281
          %v286 = vsub.f32 0.0, %v282
          %vm287 = vcmask 130048
          %v288 = vsel %vm287, %v283, 0.0
          %v289 = vsel %vm287, %v284, 0.0
          %v290 = vadd.f32 %v288, %v289
          %v291 = vsel %vm287, %v285, 0.0
          %v292 = vadd.f32 %v290, %v291
          %v293 = vsel %vm287, %v286, 0.0
          %v294 = vadd.f32 %v292, %v293
          %v295 = vadd.f32 %v234, %v294
          %296 = vst.msk [vmem:[#allocation2] sm:$0xff] %vm287, %v295
        $region36: #{tpu_custom_call.1} parent=27 // pred_fallthru
          _
        // Predicated region
        $region37: #{tpu_custom_call.1} parent=27 // pred_check
          %p297 = pneg %p229
        $region38: #{tpu_custom_call.1} parent=27 // pred_check_branch
          %299 = sbr.rel (%p297) target = $region40
        $region39: #{tpu_custom_call.1} parent=27 // pred_region
          %v300 = vld [vmem:[#allocation2] sm:$0xff]
          %v301 = vld [vmem:[%s203] sm:$0xff]
          %v302 = vld [vmem:[%s203 + $0x8] sm:$0xff]
          %v303 = vld [vmem:[%s203 + $0x10] sm:$0xff]
          %v304 = vld [vmem:[%s203 + $0x18] sm:$0xff]
          %v305 = vld [vmem:[%s215] sm:$0xff]
          %v306 = vld [vmem:[%s215 + $0x8] sm:$0xff]
          %v307 = vld [vmem:[%s215 + $0x10] sm:$0xff]
          %v308 = vld [vmem:[%s215 + $0x18] sm:$0xff]
          %v309 = vlog2.pop %v301
          %v310 = vmul.f32 %v309, 0.6931472
          %v311 = vlog2.pop %v302
          %v312 = vmul.f32 %v311, 0.6931472
          %v313 = vlog2.pop %v303
          %v314 = vmul.f32 %v313, 0.6931472
          %v315 = vlog2.pop %v304
          %v316 = vmul.f32 %v315, 0.6931472
          %v317 = vmax.f32 %v310, -100.0
          %v318 = vmax.f32 %v312, -100.0
          %v319 = vmax.f32 %v314, -100.0
          %v320 = vmax.f32 %v316, -100.0
          %v321 = vsub.f32 1.0, %v301
          %v322 = vsub.f32 1.0, %v302
          %v323 = vsub.f32 1.0, %v303
          %v324 = vsub.f32 1.0, %v304
          %v325 = vlog2.pop %v321
          %v326 = vmul.f32 %v325, 0.6931472
          %v327 = vlog2.pop %v322
          %v328 = vmul.f32 %v327, 0.6931472
          %v329 = vlog2.pop %v323
          %v330 = vmul.f32 %v329, 0.6931472
          %v331 = vlog2.pop %v324
          %v332 = vmul.f32 %v331, 0.6931472
          %v333 = vmax.f32 %v326, -100.0
          %v334 = vmax.f32 %v328, -100.0
          %v335 = vmax.f32 %v330, -100.0
          %v336 = vmax.f32 %v332, -100.0
          %v337 = vsub.f32 %v317, %v333
          %v338 = vsub.f32 %v318, %v334
          %v339 = vsub.f32 %v319, %v335
          %v340 = vsub.f32 %v320, %v336
          %v341 = vmul.f32 %v305, %v337
          %v342 = vmul.f32 %v306, %v338
          %v343 = vmul.f32 %v307, %v339
          %v344 = vmul.f32 %v308, %v340
          %v345 = vadd.f32 %v333, %v341
          %v346 = vadd.f32 %v334, %v342
          %v347 = vadd.f32 %v335, %v343
          %v348 = vadd.f32 %v336, %v344
          %v349 = vsub.f32 0.0, %v345
          %v350 = vsub.f32 0.0, %v346
          %v351 = vsub.f32 0.0, %v347
          %v352 = vsub.f32 0.0, %v348
          %v353 = vlaneseq
          %v354 = vshrl.u32 %v353, 7
          %v355 = vadd.s32 %v354, 8
          %v356 = vadd.s32 %v354, 16
          %v357 = vadd.s32 %v354, 24
          %v358 = vstv %s227
          %v359 = vadd.s32 %v358, %v354
          %v360 = vadd.s32 %v358, %v355
          %v361 = vadd.s32 %v358, %v356
          %v362 = vadd.s32 %v358, %v357
          %vm363 = vcmp.lt.s32.totalorder %v359, 32
          %vm364 = vcmp.lt.s32.totalorder %v360, 32
          %vm365 = vcmp.lt.s32.totalorder %v361, 32
          %vm366 = vcmp.lt.s32.totalorder %v362, 32
          %v367 = vsel %vm363, %v349, 0.0
          %v368 = vsel %vm364, %v350, 0.0
          %v369 = vsel %vm365, %v351, 0.0
          %v370 = vsel %vm366, %v352, 0.0
          %vm371 = vcmask 130048
          %v372 = vsel %vm371, %v367, 0.0
          %v373 = vsel %vm371, %v368, 0.0
          %v374 = vadd.f32 %v372, %v373
          %v375 = vsel %vm371, %v369, 0.0
          %v376 = vadd.f32 %v374, %v375
          %v377 = vsel %vm371, %v370, 0.0
          %v378 = vadd.f32 %v376, %v377
          %v379 = vadd.f32 %v300, %v378
          %380 = vst.msk [vmem:[#allocation2] sm:$0xff] %vm371, %v379
        $region40: #{tpu_custom_call.1} parent=27 // pred_fallthru
          _
        // Predicated region
        $region41: #{tpu_custom_call.1} parent=27 // pred_check
          %p381 = pneg %p220
        $region42: #{tpu_custom_call.1} parent=27 // pred_check_branch
          %383 = sbr.rel (%p381) target = $region44
        $region43: #{tpu_custom_call.1} parent=27 // pred_region
          %v384 = vld [vmem:[#allocation2] sm:$0xff]
          %vm385 = vcmask 130048
          %386 = vst.msk [vmem:[%s195] sm:$0xff] %vm385, %v384
        $region44: #{tpu_custom_call.1} parent=27 // pred_fallthru
          _
        %s387 = sand.u32 %s100, 1
        %s388 = scalar_lea.sflag [#allocation4], %s387
        %s389 = sand.u32 %s100, 1
        %s390 = smul.addr %s389, 8
        %s391 = scalar_lea.vmem [#allocation3], %s390
        // Predicated region
        $region45: #{tpu_custom_call.1} parent=27 // pred_check
          %p392 = pneg %p110
        $region46: #{tpu_custom_call.1} parent=27 // pred_check_branch
          %394 = sbr.rel (%p392) target = $region48
        $region47: #{tpu_custom_call.1} parent=27 // pred_region
          %396 = vsyncadd %s388, 0
          %s397 = smul.addr %s20, 8
          %s398 = scalar_lea.hbm %s2, %s397
          %s400 = sshll.u32 %s391, 4
          %s401 = int_to_ptr.vmem [resolvable:$true] %s400
          %s402 = sshll.u32 %s398, 4
          %s403 = int_to_ptr.hbm [resolvable:$true] %s402
          %405 = dma.vmem_to_hbm [thread:$0]  %s401, 128, %s403, %s388
        $region48: #{tpu_custom_call.1} parent=27 // pred_fallthru
          _
      $region28: #{tpu_custom_call.1} parent=5 // pred_fallthru
        _
      %p406 = scmp.le.s32.totalorder 2, %s11
      // Predicated region
      $region49: #{tpu_custom_call.1} parent=5 // pred_check
        %p407 = pneg %p406
      $region50: #{tpu_custom_call.1} parent=5 // pred_check_branch
        %409 = sbr.rel (%p407) target = $region52
      $region51: #{tpu_custom_call.1} parent=5 // pred_region
        %s410 = ssub.s32 %s11, 2
        // Predicated region
        $region53: #{tpu_custom_call.1} parent=51 // pred_check
          %p411 = pneg %p116
        $region54: #{tpu_custom_call.1} parent=51 // pred_check_branch
          %413 = sbr.rel (%p411) target = $region56
        $region55: #{tpu_custom_call.1} parent=51 // pred_region
          %s414 = sand.u32 %s101, 1
          %s415 = scalar_lea.sflag [#allocation4], %s414
          %s416 = sand.u32 %s101, 1
          %s417 = smul.addr %s416, 8
          %s418 = scalar_lea.vmem [#allocation3], %s417
          %420 = dma.done %s415, 128
        $region56: #{tpu_custom_call.1} parent=51 // pred_fallthru
          _
      $region52: #{tpu_custom_call.1} parent=5 // pred_fallthru
        _
    $region6: #{tpu_custom_call.1} parent=1 // loop_footer
      %s15 = sadd.s32 1, %s11
    $region7: #{tpu_custom_call.1} parent=1 // loop_footer_branch
      %10 = sbr.rel target = $region3
    $region8: #{tpu_custom_call.1} parent=1 // loop_exit
      _
    %421 = vsyncpa [#allocation4], 1
    %s422 = scalar_lea.sflag [#allocation4], 1
    %423 = vsyncpa %s422, 1

</llo_original>
